<compile_context>
chip_gen: v7x
topology: tpu7x:2x2x1
jax: 0.10.0
libtpu: 0.0.40
codegen_flags: <defaults>
</compile_context>

<pallas_src>
import functools
import math

import jax
import jax.numpy as jnp
from jax.experimental import pallas as pl
from jax.experimental.pallas import tpu as pltpu

_VMEM_LIMIT = 32 * 1024 * 1024  # explicit scoped-VMEM budget, safe on v5e/v6e/v7x


def _pick_tile(total: int, base: int, cap: int) -> int:
    """Largest multiple of `base` that divides `total` and is <= cap, else `total`."""
    if total <= cap:
        return total
    t = (cap // base) * base
    while t >= base:
        if total % t == 0:
            return t
        t -= base
    return total


def _pick_head_tile(H: int, Sq: int, Sk: int, dk: int,
                    budget: int = 8 * 1024 * 1024) -> int:
    """Largest divisor of H whose per-step attention working set fits the budget."""
    per_head = (2 * Sq * dk + 2 * Sk * dk + 2 * Sq * Sk) * 4  # f32 bytes
    th = H
    while th > 1 and per_head * th * 2 > budget:   # x2 for double buffering
        th -= 1
        while th > 1 and H % th != 0:
            th -= 1
    return max(th, 1)


# ----------------------------------------------------------------------------
# Positional encoding buffer (mirrors PositionalEncoding.__init__)
# ----------------------------------------------------------------------------
def make_positional_encoding_buffer(d_model: int, max_len: int = 5000) -> jnp.ndarray:
    assert d_model % 2 == 0, "sinusoidal PE requires an even d_model"
    position = jnp.arange(0, max_len, dtype=jnp.float32)[:, None]
    div_term = jnp.exp(
        jnp.arange(0, d_model, 2, dtype=jnp.float32) * (-math.log(10000.0) / d_model))
    angles = position * div_term
    pe = jnp.zeros((max_len, d_model), dtype=jnp.float32)
    pe = pe.at[:, 0::2].set(jnp.sin(angles))
    pe = pe.at[:, 1::2].set(jnp.cos(angles))
    return pe


# ----------------------------------------------------------------------------
# Kernel 1: fused onehot->d_model linear + positional-encoding add
# ----------------------------------------------------------------------------
def _embed_pe_kernel(x_ref, wt_ref, b_ref, pe_ref, o_ref):
    o_ref[...] = (
        jnp.dot(x_ref[...], wt_ref[...], preferred_element_type=jnp.float32)
        + b_ref[...] + pe_ref[...]
    ).astype(o_ref.dtype)


def embed_pe_forward(tgt, w, b, pe):
    """tgt: (B, S, V) one-hot; w: (D, V); b: (D,); pe: (max_len, D) -> (B, S, D)."""
    B, S, V = tgt.shape
    D = w.shape[0]
    ts = _pick_tile(S, 8, 512)
    pe_slice = pe[:S, :]
    return pl.pallas_call(
        _embed_pe_kernel,
        out_shape=jax.ShapeDtypeStruct((B, S, D), tgt.dtype),
        grid_spec=pltpu.PrefetchScalarGridSpec(
            num_scalar_prefetch=0,
            grid=(B, S // ts),
            in_specs=[
                pl.BlockSpec((None, ts, V), lambda bi, si: (bi, si, 0)),
                pl.BlockSpec((V, D), lambda bi, si: (0, 0)),    # weights resident
                pl.BlockSpec((1, D), lambda bi, si: (0, 0)),
                pl.BlockSpec((ts, D), lambda bi, si: (si, 0)),  # pe: seq-tile only
            ],
            out_specs=pl.BlockSpec((None, ts, D), lambda bi, si: (bi, si, 0)),
        ),
        compiler_params=pltpu.CompilerParams(
            dimension_semantics=("parallel", "parallel"),
            vmem_limit_bytes=_VMEM_LIMIT),
    )(tgt, w.T, b.reshape(1, D), pe_slice)


# ----------------------------------------------------------------------------
# Kernel 2: generic linear (x @ W^T + b), PyTorch weight layout (out, in)
# ----------------------------------------------------------------------------
def _linear_kernel(x_ref, wt_ref, b_ref, o_ref):
    o_ref[...] = (
        jnp.dot(x_ref[...], wt_ref[...], preferred_element_type=jnp.float32)
        + b_ref[...]
    ).astype(o_ref.dtype)


def linear_forward(x2d, w, b):
    M, K = x2d.shape
    N = w.shape[0]
    tm = _pick_tile(M, 8, 512)
    return pl.pallas_call(
        _linear_kernel,
        out_shape=jax.ShapeDtypeStruct((M, N), x2d.dtype),
        grid_spec=pltpu.PrefetchScalarGridSpec(
            num_scalar_prefetch=0,
            grid=(M // tm,),
            in_specs=[
                pl.BlockSpec((tm, K), lambda i: (i, 0)),
                pl.BlockSpec((K, N), lambda i: (0, 0)),   # weights resident across row tiles
                pl.BlockSpec((1, N), lambda i: (0, 0)),
            ],
            out_specs=pl.BlockSpec((tm, N), lambda i: (i, 0)),
        ),
        compiler_params=pltpu.CompilerParams(
            dimension_semantics=("parallel",),
            vmem_limit_bytes=_VMEM_LIMIT),
    )(x2d, w.T, b.reshape(1, N))


# ----------------------------------------------------------------------------
# Kernel 3: attention core, one (batch, head-tile) block per grid point
# ----------------------------------------------------------------------------
def _softmax_matmul(s, v_ref, o_ref):
    s_max = jnp.max(s, axis=-1, keepdims=True)
    p = jnp.exp(s - s_max)
    inv = pl.reciprocal(jnp.sum(p, axis=-1, keepdims=True), approx=True)
    o_ref[...] = jnp.einsum(
        "hqk,hkd->hqd", p * inv, v_ref[...],
        preferred_element_type=jnp.float32).astype(o_ref.dtype)


def _attn_kernel_nomask(q_ref, k_ref, v_ref, o_ref, *, scale):
    s = jnp.einsum("hqd,hkd->hqk", q_ref[...], k_ref[...],
                   preferred_element_type=jnp.float32) * scale
    _softmax_matmul(s, v_ref, o_ref)


def _attn_kernel_shared_mask(q_ref, k_ref, v_ref, m_ref, o_ref, *, scale):
    s = jnp.einsum("hqd,hkd->hqk", q_ref[...], k_ref[...],
                   preferred_element_type=jnp.float32) * scale
    s = jnp.where(m_ref[...] == 0.0, -1e9, s)   # (Sq,Sk) mask broadcast over heads
    _softmax_matmul(s, v_ref, o_ref)


def _attn_kernel_full_mask(q_ref, k_ref, v_ref, m_ref, o_ref, *, scale):
    s = jnp.einsum("hqd,hkd->hqk", q_ref[...], k_ref[...],
                   preferred_element_type=jnp.float32) * scale
    s = jnp.where(m_ref[...] == 0.0, -1e9, s)   # per-(b,h) mask
    _softmax_matmul(s, v_ref, o_ref)


def attention_core_forward(qh, kh, vh, mask, scale):
    """qh: (B,H,Sq,dk); kh/vh: (B,H,Sk,dk); mask: None | (Sq,Sk)-broadcastable | 4D."""
    B, H, Sq, dk = qh.shape
    Sk = kh.shape[2]
    th = _pick_head_tile(H, Sq, Sk, dk)
    grid = (B, H // th)
    q_spec = pl.BlockSpec((None, th, Sq, dk), lambda bi, hi: (bi, hi, 0, 0))
    kv_spec = pl.BlockSpec((None, th, Sk, dk), lambda bi, hi: (bi, hi, 0, 0))
    out_spec = pl.BlockSpec((None, th, Sq, dk), lambda bi, hi: (bi, hi, 0, 0))
    out_shape = jax.ShapeDtypeStruct((B, H, Sq, dk), qh.dtype)
    cparams = pltpu.CompilerParams(
        dimension_semantics=("parallel", "parallel"),
        vmem_limit_bytes=_VMEM_LIMIT)

    if mask is None:
        kernel = functools.partial(_attn_kernel_nomask, scale=scale)
        return pl.pallas_call(
            kernel, out_shape=out_shape,
            grid_spec=pltpu.PrefetchScalarGridSpec(
                num_scalar_prefetch=0, grid=grid,
                in_specs=[q_spec, kv_spec, kv_spec], out_specs=out_spec),
            compiler_params=cparams,
        )(qh, kh, vh)

    mask = jnp.asarray(mask, jnp.float32)
    if mask.ndim <= 2 or all(d == 1 for d in mask.shape[:-2]):
        # Shared mask: keep a single (Sq, Sk) tile resident across the whole grid.
        m2 = jnp.broadcast_to(mask.reshape(mask.shape[-2:]), (Sq, Sk))
        kernel = functools.partial(_attn_kernel_shared_mask, scale=scale)
        m_spec = pl.BlockSpec((Sq, Sk), lambda bi, hi: (0, 0))
        return pl.pallas_call(
            kernel, out_shape=out_shape,
            grid_spec=pltpu.PrefetchScalarGridSpec(
                num_scalar_prefetch=0, grid=grid,
                in_specs=[q_spec, kv_spec, kv_spec, m_spec], out_specs=out_spec),
            compiler_params=cparams,
        )(qh, kh, vh, m2)

    m4 = jnp.broadcast_to(mask, (B, H, Sq, Sk))
    kernel = functools.partial(_attn_kernel_full_mask, scale=scale)
    m_spec = pl.BlockSpec((None, th, Sq, Sk), lambda bi, hi: (bi, hi, 0, 0))
    return pl.pallas_call(
        kernel, out_shape=out_shape,
        grid_spec=pltpu.PrefetchScalarGridSpec(
            num_scalar_prefetch=0, grid=grid,
            in_specs=[q_spec, kv_spec, kv_spec, m_spec], out_specs=out_spec),
        compiler_params=cparams,
    )(qh, kh, vh, m4)


# ----------------------------------------------------------------------------
# Kernel 4: fused output projection + residual add + LayerNorm
# ----------------------------------------------------------------------------
def _linear_add_ln_kernel(a_ref, r_ref, wt_ref, b_ref, g_ref, bb_ref, o_ref, *, eps):
    y = (r_ref[...]
         + jnp.dot(a_ref[...], wt_ref[...], preferred_element_type=jnp.float32)
         + b_ref[...])
    mean = jnp.mean(y, axis=-1, keepdims=True)
    c = y - mean
    var = jnp.mean(c * c, axis=-1, keepdims=True)
    o_ref[...] = (c * jax.lax.rsqrt(var + eps) * g_ref[...] + bb_ref[...]).astype(o_ref.dtype)


def linear_add_ln_forward(a2d, r2d, w, b, gamma, beta, eps=1e-5):
    M, K = a2d.shape
    N = w.shape[0]
    tm = _pick_tile(M, 8, 512)
    kernel = functools.partial(_linear_add_ln_kernel, eps=eps)
    return pl.pallas_call(
        kernel,
        out_shape=jax.ShapeDtypeStruct((M, N), a2d.dtype),
        grid_spec=pltpu.PrefetchScalarGridSpec(
            num_scalar_prefetch=0,
            grid=(M // tm,),
            in_specs=[
                pl.BlockSpec((tm, K), lambda i: (i, 0)),
                pl.BlockSpec((tm, N), lambda i: (i, 0)),
                pl.BlockSpec((K, N), lambda i: (0, 0)),
                pl.BlockSpec((1, N), lambda i: (0, 0)),
                pl.BlockSpec((1, N), lambda i: (0, 0)),
                pl.BlockSpec((1, N), lambda i: (0, 0)),
            ],
            out_specs=pl.BlockSpec((tm, N), lambda i: (i, 0)),
        ),
        compiler_params=pltpu.CompilerParams(
            dimension_semantics=("parallel",),
            vmem_limit_bytes=_VMEM_LIMIT),
    )(a2d, r2d, w.T, b.reshape(1, N), gamma.reshape(1, N), beta.reshape(1, N))


# ----------------------------------------------------------------------------
# Kernel 5: fused feed-forward (linear -> relu -> linear) + residual + LayerNorm
# ----------------------------------------------------------------------------
def _ffn_add_ln_kernel(x_ref, w1t_ref, b1_ref, w2t_ref, b2_ref, g_ref, bb_ref,
                       o_ref, *, eps):
    x = x_ref[...]
    h = jnp.maximum(
        jnp.dot(x, w1t_ref[...], preferred_element_type=jnp.float32) + b1_ref[...], 0.0)
    y = x + jnp.dot(h, w2t_ref[...], preferred_element_type=jnp.float32) + b2_ref[...]
    mean = jnp.mean(y, axis=-1, keepdims=True)
    c = y - mean
    var = jnp.mean(c * c, axis=-1, keepdims=True)
    o_ref[...] = (c * jax.lax.rsqrt(var + eps) * g_ref[...] + bb_ref[...]).astype(o_ref.dtype)


def ffn_add_ln_forward(x2d, w1, b1, w2, b2, gamma, beta, eps=1e-5):
    M, D = x2d.shape
    F = w1.shape[0]
    tm = _pick_tile(M, 8, 512)
    kernel = functools.partial(_ffn_add_ln_kernel, eps=eps)
    return pl.pallas_call(
        kernel,
        out_shape=jax.ShapeDtypeStruct((M, D), x2d.dtype),
        grid_spec=pltpu.PrefetchScalarGridSpec(
            num_scalar_prefetch=0,
            grid=(M // tm,),
            in_specs=[
                pl.BlockSpec((tm, D), lambda i: (i, 0)),
                pl.BlockSpec((D, F), lambda i: (0, 0)),
                pl.BlockSpec((1, F), lambda i: (0, 0)),
                pl.BlockSpec((F, D), lambda i: (0, 0)),
                pl.BlockSpec((1, D), lambda i: (0, 0)),
                pl.BlockSpec((1, D), lambda i: (0, 0)),
                pl.BlockSpec((1, D), lambda i: (0, 0)),
            ],
            out_specs=pl.BlockSpec((tm, D), lambda i: (i, 0)),
        ),
        compiler_params=pltpu.CompilerParams(
            dimension_semantics=("parallel",),
            vmem_limit_bytes=_VMEM_LIMIT),
    )(x2d, w1.T, b1.reshape(1, F), w2.T, b2.reshape(1, D),
      gamma.reshape(1, D), beta.reshape(1, D))


# ----------------------------------------------------------------------------
# Module-level forward (glue = reshapes / head splits / weight concatenation only)
# ----------------------------------------------------------------------------
def decoder_layer_forward(x, memory, src_mask, tgt_mask, layer, num_heads):
    B, S, D = x.shape
    Sm = memory.shape[1]
    dk = D // num_heads
    scale = 1.0 / math.sqrt(dk)
    x2d = x.reshape(B * S, D)
    mem2d = memory.reshape(B * Sm, D)

    # --- self attention: single fused QKV projection ---
    w_qkv = jnp.concatenate([layer["sa_wq"], layer["sa_wk"], layer["sa_wv"]], axis=0)
    b_qkv = jnp.concatenate([layer["sa_bq"], layer["sa_bk"], layer["sa_bv"]], axis=0)
    qkv = linear_forward(x2d, w_qkv, b_qkv)
    qh = qkv[:, :D].reshape(B, S, num_heads, dk).transpose(0, 2, 1, 3)
    kh = qkv[:, D:2 * D].reshape(B, S, num_heads, dk).transpose(0, 2, 1, 3)
    vh = qkv[:, 2 * D:].reshape(B, S, num_heads, dk).transpose(0, 2, 1, 3)
    ah = attention_core_forward(qh, kh, vh, tgt_mask, scale)
    a2d = ah.transpose(0, 2, 1, 3).reshape(B * S, D)
    x2d = linear_add_ln_forward(a2d, x2d, layer["sa_wo"], layer["sa_bo"],
                                layer["ln1_g"], layer["ln1_b"])

    # --- cross attention: fused KV projection of memory ---
    q = linear_forward(x2d, layer["ca_wq"], layer["ca_bq"])
    w_kv = jnp.concatenate([layer["ca_wk"], layer["ca_wv"]], axis=0)
    b_kv = jnp.concatenate([layer["ca_bk"], layer["ca_bv"]], axis=0)
    kv = linear_forward(mem2d, w_kv, b_kv)
    qh = q.reshape(B, S, num_heads, dk).transpose(0, 2, 1, 3)
    kh = kv[:, :D].reshape(B, Sm, num_heads, dk).transpose(0, 2, 1, 3)
    vh = kv[:, D:].reshape(B, Sm, num_heads, dk).transpose(0, 2, 1, 3)
    ah = attention_core_forward(qh, kh, vh, src_mask, scale)
    a2d = ah.transpose(0, 2, 1, 3).reshape(B * S, D)
    x2d = linear_add_ln_forward(a2d, x2d, layer["ca_wo"], layer["ca_bo"],
                                layer["ln2_g"], layer["ln2_b"])

    # --- feed-forward + residual + LayerNorm (single fused kernel) ---
    x2d = ffn_add_ln_forward(x2d, layer["ff_w1"], layer["ff_b1"],
                             layer["ff_w2"], layer["ff_b2"],
                             layer["ln3_g"], layer["ln3_b"])
    return x2d.reshape(B, S, D)


def inst_decoder_forward(params, tgt, memory, src_mask=None, tgt_mask=None):
    B, S, V = tgt.shape
    H = params["num_heads"]
    x = embed_pe_forward(tgt, params["onehot_w"], params["onehot_b"], params["pe"])
    # TODO(synk): nn.Dropout is stochastic; implemented as identity (eval-mode semantics).
    for layer in params["layers"]:
        x = decoder_layer_forward(x, memory, src_mask, tgt_mask, layer, H)
    return x


# ----------------------------------------------------------------------------
# Parameter init + pure-JAX reference
# ----------------------------------------------------------------------------
def init_params(key, d_model, num_heads, d_ff, num_layers, vocab_size, max_len):
    keys = jax.random.split(key, 2 + num_layers)

    def dense(k, out_dim, in_dim):
        kw, kb = jax.random.split(k)
        w = jax.random.normal(kw, (out_dim, in_dim), jnp.float32) * 0.05
        b = jax.random.normal(kb, (out_dim,), jnp.float32) * 0.05
        return w, b

    onehot_w, onehot_b = dense(keys[0], d_model, vocab_size)
    layers = []
    for li in range(num_layers):
        lk = jax.random.split(keys[2 + li], 10)
        layer = {}
        for prefix, base in (("sa", 0), ("ca", 4)):
            for j, name in enumerate(("q", "k", "v", "o")):
                w, b = dense(lk[base + j], d_model, d_model)
                layer[f"{prefix}_w{name}"] = w
                layer[f"{prefix}_b{name}"] = b
        layer["ff_w1"], layer["ff_b1"] = dense(lk[8], d_ff, d_model)
        layer["ff_w2"], layer["ff_b2"] = dense(lk[9], d_model, d_ff)
        for i in (1, 2, 3):
            layer[f"ln{i}_g"] = jnp.ones((d_model,), jnp.float32)
            layer[f"ln{i}_b"] = jnp.zeros((d_model,), jnp.float32)
        layers.append(layer)
    return {"d_model": d_model, "num_heads": num_heads,
            "onehot_w": onehot_w, "onehot_b": onehot_b,
            "pe": make_positional_encoding_buffer(d_model, max_len),
            "layers": layers}


def _prep_mask(mask, B, H, Sq, Sk):
    if mask is None:
        return jnp.ones((B, H, Sq, Sk), jnp.float32)
    return jnp.broadcast_to(jnp.asarray(mask, jnp.float32), (B, H, Sq, Sk))


def _ref_linear(x, w, b):
    return jnp.dot(x, w.T, precision=jax.lax.Precision.HIGHEST) + b


def _ref_layernorm(x, g, b, eps=1e-5):
    mean = x.mean(axis=-1, keepdims=True)
    var = ((x - mean) ** 2).mean(axis=-1, keepdims=True)
    return (x - mean) / jnp.sqrt(var + eps) * g + b


def _ref_mha(x_q, x_kv, mask4, layer, prefix, num_heads):
    B, Sq, D = x_q.shape
    Sk = x_kv.shape[1]
    dk = D // num_heads
    q = _ref_linear(x_q, layer[f"{prefix}_wq"], layer[f"{prefix}_bq"])
    k = _ref_linear(x_kv, layer[f"{prefix}_wk"], layer[f"{prefix}_bk"])
    v = _ref_linear(x_kv, layer[f"{prefix}_wv"], layer[f"{prefix}_bv"])
    q = q.reshape(B, Sq, num_heads, dk).transpose(0, 2, 1, 3)
    k = k.reshape(B, Sk, num_heads, dk).transpose(0, 2, 1, 3)
    v = v.reshape(B, Sk, num_heads, dk).transpose(0, 2, 1, 3)
    s = jnp.einsum("bhqd,bhkd->bhqk", q, k,
                   precision=jax.lax.Precision.HIGHEST) / math.sqrt(dk)
    s = jnp.where(mask4 == 0, -1e9, s)
    a = jax.nn.softmax(s, axis=-1)
    o = jnp.einsum("bhqk,bhkd->bhqd", a, v, precision=jax.lax.Precision.HIGHEST)
    o = o.transpose(0, 2, 1, 3).reshape(B, Sq, D)
    return _ref_linear(o, layer[f"{prefix}_wo"], layer[f"{prefix}_bo"])


def ref_inst_decoder(params, tgt, memory, src_mask, tgt_mask):
    B, S, _ = tgt.shape
    H = params["num_heads"]
    Sm = memory.shape[1]
    x = _ref_linear(tgt, params["onehot_w"], params["onehot_b"])
    x = x + params["pe"][None, :S, :]
    tgt_m = _prep_mask(tgt_mask, B, H, S, S)
    src_m = _prep_mask(src_mask, B, H, S, Sm)
    for layer in params["layers"]:
        a = _ref_mha(x, x, tgt_m, layer, "sa", H)
        x = _ref_layernorm(x + a, layer["ln1_g"], layer["ln1_b"])
        a = _ref_mha(x, memory, src_m, layer, "ca", H)
        x = _ref_layernorm(x + a, layer["ln2_g"], layer["ln2_b"])
        f = _ref_linear(jax.nn.relu(_ref_linear(x, layer["ff_w1"], layer["ff_b1"])),
                        layer["ff_w2"], layer["ff_b2"])
        x = _ref_layernorm(x + f, layer["ln3_g"], layer["ln3_b"])
    return x


if __name__ == "__main__":
    d_model, num_heads, d_ff, num_layers = 32, 4, 64, 2
    vocab_size, max_len = 48, 64
    B, S, Sm = 2, 8, 8

    key = jax.random.PRNGKey(0)
    k_par, k_tok, k_mem = jax.random.split(key, 3)
    params = init_params(k_par, d_model, num_heads, d_ff, num_layers, vocab_size, max_len)

    token_ids = jax.random.randint(k_tok, (B, S), 0, vocab_size)
    tgt = jax.nn.one_hot(token_ids, vocab_size, dtype=jnp.float32)      # (B, S, vocab)
    memory = jax.random.normal(k_mem, (B, Sm, d_model), jnp.float32)    # encoder output
    tgt_mask = jnp.tril(jnp.ones((S, S), jnp.float32))                  # causal mask
    src_mask = None

    out = inst_decoder_forward(params, tgt, memory, src_mask=src_mask, tgt_mask=tgt_mask)
    out = jax.block_until_ready(out)

    ref = ref_inst_decoder(params, tgt, memory, src_mask, tgt_mask)
    assert out.shape == (B, S, d_model)
    assert bool(jnp.all(jnp.isfinite(out)))
    max_err = float(jnp.max(jnp.abs(out - ref)))
    assert max_err < 2e-2, f"mismatch vs reference: max abs err = {max_err}"

    print("KERNEL_OK")
</pallas_src>

<mosaic_0001>
module attributes {stable_mosaic.version = 11 : i64} {
  func.func @_embed_pe_kernel(%arg0: i32, %arg1: i32, %arg2: memref<1x8x48xf32, #tpu.memory_space<vmem>>, %arg3: memref<48x32xf32, #tpu.memory_space<vmem>>, %arg4: memref<1x32xf32, #tpu.memory_space<vmem>>, %arg5: memref<8x32xf32, #tpu.memory_space<vmem>>, %arg6: memref<1x8x32xf32, #tpu.memory_space<vmem>>) attributes {dimension_semantics = [#tpu.dimension_semantics<parallel>, #tpu.dimension_semantics<parallel>], iteration_bounds = array<i64: 2, 1>, scalar_prefetch = 0 : i64, scratch_operands = 0 : i64, tpu.core_type = #tpu.core_type<tc>, window_params = [{transform_indices = @transform_0, window_bounds = array<i64: 1, 8, 48>}, {pipeline_mode = #tpu.pipeline_mode<synchronous>, transform_indices = @transform_1, window_bounds = array<i64: 48, 32>}, {pipeline_mode = #tpu.pipeline_mode<synchronous>, transform_indices = @transform_2, window_bounds = array<i64: 1, 32>}, {transform_indices = @transform_3, window_bounds = array<i64: 8, 32>}, {transform_indices = @transform_4, window_bounds = array<i64: 1, 8, 32>}]} {
    %c0 = arith.constant 0 : index
    %c0_0 = arith.constant 0 : index
    %c0_1 = arith.constant 0 : index
    %0 = vector.load %arg2[%c0, %c0_0, %c0_1] : memref<1x8x48xf32, #tpu.memory_space<vmem>>, vector<1x8x48xf32>
    %1 = vector.shape_cast %0 : vector<1x8x48xf32> to vector<8x48xf32>
    %c0_2 = arith.constant 0 : index
    %c0_3 = arith.constant 0 : index
    %2 = vector.load %arg3[%c0_2, %c0_3] : memref<48x32xf32, #tpu.memory_space<vmem>>, vector<48x32xf32>
    %cst = arith.constant dense<0.000000e+00> : vector<8x32xf32>
    %3 = tpu.matmul %1, %2, %cst {dimension_numbers = #tpu.dot_dimension_numbers<[1], [0], [0], [1], [0, 0, 1, 1], [], []>} : vector<8x48xf32>, vector<48x32xf32>, vector<8x32xf32> -> vector<8x32xf32>
    %c0_4 = arith.constant 0 : index
    %c0_5 = arith.constant 0 : index
    %4 = vector.load %arg4[%c0_4, %c0_5] : memref<1x32xf32, #tpu.memory_space<vmem>>, vector<1x32xf32>
    %5 = vector.broadcast %4 : vector<1x32xf32> to vector<8x32xf32>
    %6 = arith.addf %3, %5 : vector<8x32xf32>
    %c0_6 = arith.constant 0 : index
    %c0_7 = arith.constant 0 : index
    %7 = vector.load %arg5[%c0_6, %c0_7] : memref<8x32xf32, #tpu.memory_space<vmem>>, vector<8x32xf32>
    %8 = arith.addf %6, %7 : vector<8x32xf32>
    %c0_8 = arith.constant 0 : index
    %c0_9 = arith.constant 0 : index
    %c0_10 = arith.constant 0 : index
    %9 = vector.load %arg6[%c0_8, %c0_9, %c0_10] : memref<1x8x32xf32, #tpu.memory_space<vmem>>, vector<1x8x32xf32>
    %10 = vector.shape_cast %9 : vector<1x8x32xf32> to vector<8x32xf32>
    %11 = vector.shape_cast %8 : vector<8x32xf32> to vector<1x8x32xf32>
    tpu.vector_store %arg6[%c0_8, %c0_9, %c0_10], %11 {strides = array<i32>} : memref<1x8x32xf32, #tpu.memory_space<vmem>>, vector<1x8x32xf32>,
    return
  }
  func.func @transform_0(%arg0: i32, %arg1: i32) -> (i32, i32, i32) {
    %c0_i32 = arith.constant 0 : i32
    %c0_i32_0 = arith.constant 0 : i32
    return %arg0, %arg1, %c0_i32 : i32, i32, i32
  }
  func.func @transform_1(%arg0: i32, %arg1: i32) -> (i32, i32) {
    %c0_i32 = arith.constant 0 : i32
    %c0_i32_0 = arith.constant 0 : i32
    %c0_i32_1 = arith.constant 0 : i32
    return %c0_i32, %c0_i32_0 : i32, i32
  }
  func.func @transform_2(%arg0: i32, %arg1: i32) -> (i32, i32) {
    %c0_i32 = arith.constant 0 : i32
    %c0_i32_0 = arith.constant 0 : i32
    %c0_i32_1 = arith.constant 0 : i32
    return %c0_i32, %c0_i32_0 : i32, i32
  }
  func.func @transform_3(%arg0: i32, %arg1: i32) -> (i32, i32) {
    %c0_i32 = arith.constant 0 : i32
    %c0_i32_0 = arith.constant 0 : i32
    return %arg1, %c0_i32 : i32, i32
  }
  func.func @transform_4(%arg0: i32, %arg1: i32) -> (i32, i32, i32) {
    %c0_i32 = arith.constant 0 : i32
    %c0_i32_0 = arith.constant 0 : i32
    return %arg0, %arg1, %c0_i32 : i32, i32, i32
  }
}

</mosaic_0001>

<llo_original>
// kernel: tpu_custom_call.1
$region0: #{tpu_custom_call.1}
  #allocation0 [shape = 'u32[]', space=smem, size = 0x4, offset = 0x4, fixed_abs, tag = 'smem constant byte address 0x4 - core index']
  #allocation1 [shape = 'u32[144,128]{1,0:T(1,128)}', space=vmem, size = 0x12000, scoped, tag = 'internal scratch']
  %s0 = inlined_call_operand.vmem [shape: f32[2,8,48], index: 0, kind: input, shape index: {}]
  %s1 = inlined_call_operand.vmem [shape: f32[48,32], index: 1, kind: input, shape index: {}]
  %s2 = inlined_call_operand.vmem [shape: f32[1,32], index: 2, kind: input, shape index: {}]
  %s3 = inlined_call_operand.vmem [shape: f32[8,32], index: 3, kind: input, shape index: {}]
  %s4 = inlined_call_operand.hbm [shape: f32[2,8,32], index: 4, kind: output, shape index: {}]
  %s5 = sld [smem:[#allocation0]]
  $region49: #{tpu_custom_call.1} parent=0
    _
  %s7 = ssub.s32 1, %s5
  %s8 = scalar_select 0, %s7, %s5
  $region1: #{tpu_custom_call.1} parent=0
    #allocation2 [shape = 'u8[8192]{0}', space=vmem, size = 0x2000, scoped, tag = 'output window, operand 0']
    #allocation3 [shape = 's32[2]{0}', space=sflag, size = 0x8, scoped, tag = 'scoped memory for tpu_custom_call.1']
    %9 = vsyncpa [#allocation3], 0
    %s10 = scalar_lea.sflag [#allocation3], 1
    %11 = vsyncpa %s10, 0
    loop: start=0, step=1, limit=4
    $region2: #{tpu_custom_call.1} parent=1 // loop_pre_header
      _
    $region3: #{tpu_custom_call.1} parent=1 // loop_header
      %s13 = sphi 0, %s17
      %p14 = scmp.ge.s32.totalorder %s13, 4
      %s20 = sphi 0, %s32
      %s21 = sphi 0, %s28
      %s22 = sphi 0, %s20
      %s23 = sphi 0, %s21
      %s24 = sphi 0, %s22
      %s25 = sphi 0, %s23
      %s37 = sphi 0, %s39
      %s40 = sphi 0, %s37
      %s41 = sphi 0, %s40
      %s57 = sphi 0, %s41
      %s61 = sphi 0, %s61
      %s63 = sphi 0, %s61
      %s64 = sphi 0, %s63
      %s78 = sphi 0, %s64
      %s82 = sphi 0, %s82
      %s84 = sphi 0, %s82
      %s85 = sphi 0, %s84
      %s99 = sphi 0, %s85
      %s105 = sphi 0, %s107
      %s108 = sphi 0, %s105
      %s109 = sphi 0, %s108
      %s125 = sphi 0, %s109
      %s133 = sphi 0, %s135
      %s136 = sphi 0, %s133
      %s137 = sphi 0, %s136
      %s153 = sphi 0, %s137
    $region4: #{tpu_custom_call.1} parent=1 // loop_header_branch
      %16 = sbr.rel (%p14) target = $region8
    $region5: #{tpu_custom_call.1} parent=1 // loop_body
      %s18 = ssub.s32 %s13, 1
      %s19 = ssub.s32 %s13, 2
      %s26 = sadd.s32 1, %s21
      %p27 = scmp.ge.s32.totalorder %s26, 1
      %s28 = scalar_select %p27, 0, %s26
      %s29 = sadd.s32 1, %s20
      %s30 = scalar_select %p27, %s29, %s20
      %p31 = scmp.ge.s32.totalorder %s30, 2
      %s32 = scalar_select %p31, 0, %s30
      %s33 = ssub.s32 %s20, %s32
      %s34 = ssub.s32 %s21, %s28
      %s35 = sor.u32 %s33, %s34
      %p36 = scmp.eq.s32.totalorder %s35, 0
      %s38 = sadd.s32 %s37, 1
      %s39 = scalar_select %p36, %s37, %s38
      %p42 = pneg %p36
      %p43 = scmp.eq.s32.totalorder %s13, 1
      %p44 = por %p42, %p43
      %p45 = scmp.ne.s32.totalorder %s37, %s40
      %p46 = scmp.eq.s32.totalorder %s13, 0
      %p47 = por %p45, %p46
      %p48 = scmp.ne.s32.totalorder %s37, %s40
      %p49 = scmp.eq.s32.totalorder %s18, 1
      %p50 = por %p48, %p49
      %p51 = scmp.ne.s32.totalorder %s40, %s41
      %p52 = scmp.eq.s32.totalorder %s18, 0
      %p53 = por %p51, %p52
      %p54 = scmp.ne.s32.totalorder %s40, %s41
      %p55 = scmp.eq.s32.totalorder %s19, 1
      %p56 = por %p54, %p55
      %p58 = scmp.ne.s32.totalorder %s41, %s57
      %p59 = scmp.eq.s32.totalorder %s19, 0
      %p60 = por %p58, %p59
      %s62 = sadd.s32 %s61, 1
      %p65 = scmp.eq.s32.totalorder %s13, 1
      %p66 = scmp.ne.s32.totalorder %s61, %s63
      %p67 = scmp.eq.s32.totalorder %s13, 0
      %p68 = por %p66, %p67
      %p69 = scmp.ne.s32.totalorder %s61, %s63
      %p70 = scmp.eq.s32.totalorder %s18, 1
      %p71 = por %p69, %p70
      %p72 = scmp.ne.s32.totalorder %s63, %s64
      %p73 = scmp.eq.s32.totalorder %s18, 0
      %p74 = por %p72, %p73
      %p75 = scmp.ne.s32.totalorder %s63, %s64
      %p76 = scmp.eq.s32.totalorder %s19, 1
      %p77 = por %p75, %p76
      %p79 = scmp.ne.s32.totalorder %s64, %s78
      %p80 = scmp.eq.s32.totalorder %s19, 0
      %p81 = por %p79, %p80
      %s83 = sadd.s32 %s82, 1
      %p86 = scmp.eq.s32.totalorder %s13, 1
      %p87 = scmp.ne.s32.totalorder %s82, %s84
      %p88 = scmp.eq.s32.totalorder %s13, 0
      %p89 = por %p87, %p88
      %p90 = scmp.ne.s32.totalorder %s82, %s84
      %p91 = scmp.eq.s32.totalorder %s18, 1
      %p92 = por %p90, %p91
      %p93 = scmp.ne.s32.totalorder %s84, %s85
      %p94 = scmp.eq.s32.totalorder %s18, 0
      %p95 = por %p93, %p94
      %p96 = scmp.ne.s32.totalorder %s84, %s85
      %p97 = scmp.eq.s32.totalorder %s19, 1
      %p98 = por %p96, %p97
      %p100 = scmp.ne.s32.totalorder %s85, %s99
      %p101 = scmp.eq.s32.totalorder %s19, 0
      %p102 = por %p100, %p101
      %s103 = ssub.s32 %s21, %s28
      %p104 = scmp.eq.s32.totalorder %s103, 0
      %s106 = sadd.s32 %s105, 1
      %s107 = scalar_select %p104, %s105, %s106
      %p110 = pneg %p104
      %p111 = scmp.eq.s32.totalorder %s13, 1
      %p112 = por %p110, %p111
      %p113 = scmp.ne.s32.totalorder %s105, %s108
      %p114 = scmp.eq.s32.totalorder %s13, 0
      %p115 = por %p113, %p114
      %p116 = scmp.ne.s32.totalorder %s105, %s108
      %p117 = scmp.eq.s32.totalorder %s18, 1
      %p118 = por %p116, %p117
      %p119 = scmp.ne.s32.totalorder %s108, %s109
      %p120 = scmp.eq.s32.totalorder %s18, 0
      %p121 = por %p119, %p120
      %p122 = scmp.ne.s32.totalorder %s108, %s109
      %p123 = scmp.eq.s32.totalorder %s19, 1
      %p124 = por %p122, %p123
      %p126 = scmp.ne.s32.totalorder %s109, %s125
      %p127 = scmp.eq.s32.totalorder %s19, 0
      %p128 = por %p126, %p127
      %s129 = ssub.s32 %s20, %s32
      %s130 = ssub.s32 %s21, %s28
      %s131 = sor.u32 %s129, %s130
      %p132 = scmp.eq.s32.totalorder %s131, 0
      %s134 = sadd.s32 %s133, 1
      %s135 = scalar_select %p132, %s133, %s134
      %p138 = pneg %p132
      %p139 = scmp.eq.s32.totalorder %s13, 1
      %p140 = por %p138, %p139
      %p141 = scmp.ne.s32.totalorder %s133, %s136
      %p142 = scmp.eq.s32.totalorder %s13, 0
      %p143 = por %p141, %p142
      %p144 = scmp.ne.s32.totalorder %s133, %s136
      %p145 = scmp.eq.s32.totalorder %s18, 1
      %p146 = por %p144, %p145
      %p147 = scmp.ne.s32.totalorder %s136, %s137
      %p148 = scmp.eq.s32.totalorder %s18, 0
      %p149 = por %p147, %p148
      %p150 = scmp.ne.s32.totalorder %s136, %s137
      %p151 = scmp.eq.s32.totalorder %s19, 1
      %p152 = por %p150, %p151
      %p154 = scmp.ne.s32.totalorder %s137, %s153
      %p155 = scmp.eq.s32.totalorder %s19, 0
      %p156 = por %p154, %p155
      %p157 = scmp.le.s32.totalorder 1, %s13
      %p158 = scmp.lt.s32.totalorder %s13, 3
      %p159 = pnand %p157, %p158
      %p160 = pneg %p159
      // Predicated region
      $region9: #{tpu_custom_call.1} parent=5 // pred_check
        _
      $region10: #{tpu_custom_call.1} parent=5 // pred_check_branch
        %162 = sbr.rel (%p159) target = $region12
      $region11: #{tpu_custom_call.1} parent=5 // pred_region
        %s163 = ssub.s32 %s13, 1
        // Predicated region
        $region13: #{tpu_custom_call.1} parent=11 // pred_check
          %p164 = pneg %p74
        $region14: #{tpu_custom_call.1} parent=11 // pred_check_branch
          %166 = sbr.rel (%p164) target = $region16
        $region15: #{tpu_custom_call.1} parent=11 // pred_region
          _
        $region16: #{tpu_custom_call.1} parent=11 // pred_fallthru
          _
        // Predicated region
        $region17: #{tpu_custom_call.1} parent=11 // pred_check
          %p167 = pneg %p95
        $region18: #{tpu_custom_call.1} parent=11 // pred_check_branch
          %169 = sbr.rel (%p167) target = $region20
        $region19: #{tpu_custom_call.1} parent=11 // pred_region
          _
        $region20: #{tpu_custom_call.1} parent=11 // pred_fallthru
          _
        // Predicated region
        $region21: #{tpu_custom_call.1} parent=11 // pred_check
          %p170 = pneg %p121
        $region22: #{tpu_custom_call.1} parent=11 // pred_check_branch
          %172 = sbr.rel (%p170) target = $region24
        $region23: #{tpu_custom_call.1} parent=11 // pred_region
          %p173 = scmp.lt.s32.totalorder %s23, 0
          %s174 = scalar_select %p173, %s23, 0
          %s175 = smul.addr %s174, 8
          %s176 = scalar_lea.vmem %s3, %s175
        $region24: #{tpu_custom_call.1} parent=11 // pred_fallthru
          _
      $region12: #{tpu_custom_call.1} parent=5 // pred_fallthru
        _
      %p177 = scmp.lt.s32.totalorder %s13, 2
      // Predicated region
      $region25: #{tpu_custom_call.1} parent=5 // pred_check
        %p178 = pneg %p177
      $region26: #{tpu_custom_call.1} parent=5 // pred_check_branch
        %180 = sbr.rel (%p178) target = $region28
      $region27: #{tpu_custom_call.1} parent=5 // pred_region
        // Predicated region
        $region29: #{tpu_custom_call.1} parent=27 // pred_check
          %p181 = pneg %p47
        $region30: #{tpu_custom_call.1} parent=27 // pred_check_branch
          %183 = sbr.rel (%p181) target = $region32
        $region31: #{tpu_custom_call.1} parent=27 // pred_region
          %p184 = scmp.lt.s32.totalorder %s20, 1
          %s185 = scalar_select %p184, %s20, 1
          %p186 = scmp.lt.s32.totalorder %s21, 0
          %s187 = scalar_select %p186, %s21, 0
          %s188 = sadd.s32 %s187, %s185
          %s189 = smul.addr %s188, 8
          %s190 = scalar_lea.vmem %s0, %s189
        $region32: #{tpu_custom_call.1} parent=27 // pred_fallthru
          _
      $region28: #{tpu_custom_call.1} parent=5 // pred_fallthru
        _
      %p191 = scmp.le.s32.totalorder 1, %s13
      %p192 = scmp.lt.s32.totalorder %s13, 3
      %p193 = pnand %p191, %p192
      %p194 = pneg %p193
      // Predicated region
      $region33: #{tpu_custom_call.1} parent=5 // pred_check
        _
      $region34: #{tpu_custom_call.1} parent=5 // pred_check_branch
        %196 = sbr.rel (%p193) target = $region36
      $region35: #{tpu_custom_call.1} parent=5 // pred_region
        %s197 = ssub.s32 %s13, 1
        %p198 = scmp.lt.s32.totalorder %s22, 1
        %s199 = scalar_select %p198, %s22, 1
        %p200 = scmp.lt.s32.totalorder %s23, 0
        %s201 = scalar_select %p200, %s23, 0
        %s202 = sadd.s32 %s201, %s199
        %s203 = smul.addr %s202, 8
        %s204 = scalar_lea.vmem %s0, %s203
        %p205 = pneg %p53
        %p206 = pneg %p50
        %p207 = pneg %p74
        %p208 = pneg %p71
        %p209 = pneg %p95
        %p210 = pneg %p92
        %p211 = scmp.lt.s32.totalorder %s23, 0
        %s212 = scalar_select %p211, %s23, 0
        %s213 = smul.addr %s212, 8
        %s214 = scalar_lea.vmem %s3, %s213
        %p215 = pneg %p121
        %p216 = pneg %p118
        %p217 = pneg %p149
        %p218 = pneg %p146
        %s219 = sand.u32 %s136, 1
        %s220 = scalar_lea.sflag [#allocation3], %s219
        %s221 = sand.u32 %s136, 1
        %s222 = smul.addr %s221, 8
        %s223 = scalar_lea.vmem [#allocation2], %s222
        %p224 = scmp.lt.s32.totalorder %s22, 1
        %s225 = scalar_select %p224, %s22, 1
        %p226 = scmp.lt.s32.totalorder %s23, 0
        %s227 = scalar_select %p226, %s23, 0
        %s228 = sadd.s32 %s227, %s225
        %s229 = smul.addr %s228, 8
        %s230 = scalar_lea.vmem %s0, %s229
        %p231 = scmp.lt.s32.totalorder %s23, 0
        %s232 = scalar_select %p231, %s23, 0
        %s233 = smul.addr %s232, 8
        %s234 = scalar_lea.vmem %s3, %s233
        %v235 = vld [vmem:[%s230] sm:$0xff]
        %v236 = vld [vmem:[%s1] sm:$0xff]
        %v237 = vld [vmem:[%s1 + $0x8] sm:$0xff]
        %v238 = vld [vmem:[%s1 + $0x10] sm:$0xff]
        %v239 = vld [vmem:[%s1 + $0x18] sm:$0xff]
        %v240 = vld [vmem:[%s1 + $0x20] sm:$0xff]
        %v241 = vld [vmem:[%s1 + $0x28] sm:$0xff]
        %v242 = vld [vmem:[%s2] sm:$0x1]
        %v244 = vlaneseq
        %v245 = vshrl.u32 %v244, 7
        %v246 = vsub.s32 0, %v245
        %v247 = vrot.slane %v242, %v246
        %vm249 = vcmask 392192
        %v251 = vsel %vm249, %v235, 0
        %253 = vmatprep.subr.mxu0 0.0
        %254 = vmatpush1.msra.mxu0 %v236
        %255 = vmatprep.subr.mxu0 0.0
        %256 = vmatpush1.msra.mxu0 %v237
        %257 = vmatprep.subr.mxu0 0.0
        %258 = vmatpush1.msra.mxu0 %v238
        %259 = vmatprep.subr.mxu0 0.0
        %260 = vmatpush1.msra.mxu0 %v239
        %261 = vmatprep.subr.mxu0 0.0
        %262 = vmatpush1.msra.mxu0 %v240
        %263 = vmatprep.subr.mxu0 0.0
        %264 = vmatpush1.msra.mxu0 %v241
        %265 = vmatprep.subr.mxu0 0.0
        %266 = vmatpush1.msra.mxu0 0.0
        %267 = vmatprep.subr.mxu0 0.0
        %268 = vmatpush1.msra.mxu0 0.0
        %269 = vmatprep.subr.mxu0 0.0
        %270 = vmatpush1.msra.mxu0 0.0
        %271 = vmatprep.subr.mxu0 0.0
        %272 = vmatpush1.msra.mxu0 0.0
        %273 = vmatprep.subr.mxu0 0.0
        %274 = vmatpush1.msra.mxu0 0.0
        %275 = vmatprep.subr.mxu0 0.0
        %276 = vmatpush1.msra.mxu0 0.0
        %277 = vmatprep.subr.mxu0 0.0
        %278 = vmatpush1.msra.mxu0 0.0
        %279 = vmatprep.subr.mxu0 0.0
        %280 = vmatpush1.msra.mxu0 0.0
        %281 = vmatprep.subr.mxu0 0.0
        %282 = vmatpush1.msra.mxu0 0.0
        %283 = vmatprep.subr.mxu0 0.0
        %284 = vmatpush1.msra.mxu0 0.0
        %285 = vmatprep.subr.mxu0 0.0
        %286 = vmatpush1.msra.mxu0 0.0
        %287 = vmatprep.subr.mxu0 0.0
        %288 = vmatpush1.msra.mxu0 0.0
        %289 = vmatprep.subr.mxu0 0.0
        %290 = vmatpush1.msra.mxu0 0.0
        %291 = vmatprep.subr.mxu0 0.0
        %292 = vmatpush1.msra.mxu0 0.0
        %293 = vmatprep.subr.mxu0 0.0
        %294 = vmatpush1.msra.mxu0 0.0
        %295 = vmatprep.subr.mxu0 0.0
        %296 = vmatpush1.msra.mxu0 0.0
        %297 = vmatprep.subr.mxu0 0.0
        %298 = vmatpush1.msra.mxu0 0.0
        %299 = vmatprep.subr.mxu0 0.0
        %300 = vmatpush1.msra.mxu0 0.0
        %301 = vmatprep.subr.mxu0 0.0
        %302 = vmatpush1.msra.mxu0 0.0
        %303 = vmatprep.subr.mxu0 0.0
        %304 = vmatpush1.msra.mxu0 0.0
        %305 = vmatprep.subr.mxu0 0.0
        %306 = vmatpush1.msra.mxu0 0.0
        %307 = vmatprep.subr.mxu0 0.0
        %308 = vmatpush1.msra.mxu0 0.0
        %309 = vmatprep.subr.mxu0 0.0
        %310 = vmatpush1.msra.mxu0 0.0
        %311 = vmatprep.subr.mxu0 0.0
        %312 = vmatpush1.msra.mxu0 0.0
        %313 = vmatprep.subr.mxu0 0.0
        %314 = vmatpush1.msra.mxu0 0.0
        %315 = vmatprep.subr.mxu0 0.0
        %316 = vmatpush1.msra.mxu0 0.0
        %317 = vmatprep.mubr.f32.mxu0 0.0
        %318 = vmatmul.mubr.f32.gmra.mrb[0].mxu0 %v251
        %v319 = vpop.f32.mrb[0].mxu0
        %v320 = vadd.f32 %v247, %v319
        %v321 = vpop.f32.mrb[0].mxu0
        %322 = vdwg.mxu0
        %v323 = vld [vmem:[%s234] sm:$0xff]
        %v324 = vadd.f32 %v320, %v323
        %vm325 = vcmask 261120
        %326 = vst.msk [vmem:[%s223] sm:$0xff] %vm325, %v324
        %s327 = sand.u32 %s136, 1
        %s328 = scalar_lea.sflag [#allocation3], %s327
        %s329 = sand.u32 %s136, 1
        %s330 = smul.addr %s329, 8
        %s331 = scalar_lea.vmem [#allocation2], %s330
        // Predicated region
        $region37: #{tpu_custom_call.1} parent=35 // pred_check
          %p332 = pneg %p146
        $region38: #{tpu_custom_call.1} parent=35 // pred_check_branch
          %334 = sbr.rel (%p332) target = $region40
        $region39: #{tpu_custom_call.1} parent=35 // pred_region
          %s336 = ssub.s32 128, 128
          %337 = vsyncadd %s328, %s336
          %s338 = sadd.s32 %s23, %s22
          %s339 = smul.addr %s338, 128
          %s340 = scalar_lea.hbm %s4, %s339
          %s342 = sshll.u32 %s331, 4
          %s343 = int_to_ptr.vmem [resolvable:$true] %s342
          %345 = dma.vmem_to_hbm [thread:$0]  %s343, 128, %s340, %s328
        $region40: #{tpu_custom_call.1} parent=35 // pred_fallthru
          _
      $region36: #{tpu_custom_call.1} parent=5 // pred_fallthru
        _
      %p346 = scmp.le.s32.totalorder 2, %s13
      // Predicated region
      $region41: #{tpu_custom_call.1} parent=5 // pred_check
        %p347 = pneg %p346
      $region42: #{tpu_custom_call.1} parent=5 // pred_check_branch
        %349 = sbr.rel (%p347) target = $region44
      $region43: #{tpu_custom_call.1} parent=5 // pred_region
        %s350 = ssub.s32 %s13, 2
        // Predicated region
        $region45: #{tpu_custom_call.1} parent=43 // pred_check
          %p351 = pneg %p152
        $region46: #{tpu_custom_call.1} parent=43 // pred_check_branch
          %353 = sbr.rel (%p351) target = $region48
        $region47: #{tpu_custom_call.1} parent=43 // pred_region
          %s354 = sand.u32 %s137, 1
          %s355 = scalar_lea.sflag [#allocation3], %s354
          %s356 = sand.u32 %s137, 1
          %s357 = smul.addr %s356, 8
          %s358 = scalar_lea.vmem [#allocation2], %s357
          %359 = dma.done %s355, 128
        $region48: #{tpu_custom_call.1} parent=43 // pred_fallthru
          _
      $region44: #{tpu_custom_call.1} parent=5 // pred_fallthru
        _
    $region6: #{tpu_custom_call.1} parent=1 // loop_footer
      %s17 = sadd.s32 1, %s13
    $region7: #{tpu_custom_call.1} parent=1 // loop_footer_branch
      %12 = sbr.rel target = $region3
    $region8: #{tpu_custom_call.1} parent=1 // loop_exit
      _
    %360 = vsyncpa [#allocation3], 1
    %s361 = scalar_lea.sflag [#allocation3], 1
    %362 = vsyncpa %s361, 1

</llo_original>
